<compile_context>
chip_gen: v5e
topology: v5e:2x2
jax: 0.10.0
libtpu: 0.0.40
codegen_flags: <defaults>
</compile_context>

<pallas_src>
import jax
import jax.numpy as jnp
from jax.experimental import pallas as pl
from jax.experimental.pallas import tpu as pltpu

LANES = 128
ACC_ROWS = 64            # accumulator sublane depth (8 f32 vregs per slab)
ROW_ALIGN = 64           # tile_rows multiple of this (covers f32/bf16/bool tiling)
MAX_TILE_ROWS = 8192     # 8192*128*4 B = 4 MiB per f32 input block
NCORES = 2               # parallel grid axis -> both TensorCores on v7x


def _round_up(x, m):
    return ((x + m - 1) // m) * m


def _make_kernel(tile_rows, steps_per_core, total_steps, valid_rows):
    groups = tile_rows // ACC_ROWS

    def kernel(pred_ref, true_ref, mask_ref, sq_out, cnt_out):
        core = pl.program_id(0)
        step = pl.program_id(1)
        logical = core * steps_per_core + step   # logical block index

        @pl.when(step == 0)
        def _():
            sq_out[...] = jnp.zeros_like(sq_out)
            cnt_out[...] = jnp.zeros_like(cnt_out)

        def accumulate(active):
            # All arithmetic in f32 on the VPU; inputs stay narrow in HBM.
            d = pred_ref[...].astype(jnp.float32) - true_ref[...].astype(jnp.float32)
            sq = jnp.where(active, d * d, 0.0)          # select: garbage in OOB
            cf = jnp.where(active, 1.0, 0.0)            # region cannot propagate
            # Leading-axis reduction = pure vreg adds (no lane crossing),
            # ACC_ROWS-deep slab keeps plenty of ILP and tiny RMW traffic.
            sq_out[0] += sq.reshape(groups, ACC_ROWS, LANES).sum(axis=0)
            cnt_out[0] += cf.reshape(groups, ACC_ROWS, LANES).sum(axis=0)

        # Full interior blocks: mask only (cheapest path).
        @pl.when(logical < total_steps - 1)
        def _():
            accumulate(mask_ref[...])

        # Last (possibly partial) block and any overhang step of the 2-way
        # core split: also mask out rows beyond the real row count.
        @pl.when(logical >= total_steps - 1)
        def _():
            row = logical * tile_rows + jax.lax.broadcasted_iota(
                jnp.int32, (tile_rows, LANES), 0)
            accumulate(jnp.logical_and(mask_ref[...], row < valid_rows))

    return kernel


def masked_mse_loss(y_pred, y_true, mask):
    """Masked MSE with reduction='mean'. Returns a float32 scalar (NaN if the
    mask selects nothing, matching torch.masked_select + MSELoss)."""
    assert y_pred.shape == y_true.shape == mask.shape

    pred = jnp.ravel(y_pred)
    true = jnp.ravel(y_true)
    if not jnp.issubdtype(pred.dtype, jnp.floating):
        pred = pred.astype(jnp.float32)
    if not jnp.issubdtype(true.dtype, jnp.floating):
        true = true.astype(jnp.float32)
    msk = jnp.ravel(mask)
    if msk.dtype != jnp.bool_:
        msk = msk != 0                     # bool mask streamed directly (1 B/elem)

    n = pred.shape[0]
    # Only pad when the flat size is not lane-aligned (rare for NN tensors);
    # when n % 128 == 0 no HBM copies happen here (reshape is free).
    n_pad = _round_up(max(n, 1), LANES)
    if n_pad != n:
        pad = n_pad - n
        pred = jnp.pad(pred, (0, pad))
        true = jnp.pad(true, (0, pad))
        msk = jnp.pad(msk, (0, pad))       # False -> padding never counted
    rows = n_pad // LANES

    pred2 = pred.reshape(rows, LANES)
    true2 = true.reshape(rows, LANES)
    msk2 = msk.reshape(rows, LANES)

    # Tile selection: adapt down for small inputs, cap at 4 MiB f32 blocks.
    tile_rows = min(MAX_TILE_ROWS, _round_up(pl.cdiv(rows, NCORES), ROW_ALIGN))
    total_steps = pl.cdiv(rows, tile_rows)
    steps_per_core = pl.cdiv(total_steps, NCORES)
    last_block = total_steps - 1

    def data_map(i, j):
        # Clamp so the overhang step of the core split never issues a fully
        # out-of-bounds DMA; its contribution is zeroed by the row mask.
        return (jnp.minimum(i * steps_per_core + j, last_block), 0)

    data_spec = pl.BlockSpec((tile_rows, LANES), data_map)
    acc_spec = pl.BlockSpec((1, ACC_ROWS, LANES), lambda i, j: (i, 0, 0))

    bytes_accessed = (pred2.size * pred2.dtype.itemsize
                      + true2.size * true2.dtype.itemsize
                      + msk2.size * 1
                      + 2 * NCORES * ACC_ROWS * LANES * 4)

    kernel = _make_kernel(tile_rows, steps_per_core, total_steps, rows)

    out_sq, out_cnt = pl.pallas_call(
        kernel,
        out_shape=(
            jax.ShapeDtypeStruct((NCORES, ACC_ROWS, LANES), jnp.float32),
            jax.ShapeDtypeStruct((NCORES, ACC_ROWS, LANES), jnp.float32),
        ),
        grid=(NCORES, steps_per_core),
        in_specs=[data_spec, data_spec, data_spec],
        out_specs=(acc_spec, acc_spec),
        compiler_params=pltpu.CompilerParams(
            dimension_semantics=("parallel", "arbitrary"),
            vmem_limit_bytes=32 * 1024 * 1024,
        ),
        cost_estimate=pl.CostEstimate(
            flops=6 * n_pad, transcendentals=0, bytes_accessed=bytes_accessed),
    )(pred2, true2, msk2)

    # Final combine of the per-core / per-lane partials (cheap, in plain JAX).
    return jnp.sum(out_sq) / jnp.sum(out_cnt)


if __name__ == "__main__":
    key = jax.random.PRNGKey(0)
    k1, k2, k3 = jax.random.split(key, 3)

    shape = (2, 4, 16, 16)  # NCHW-style example input
    y_pred = jax.random.normal(k1, shape, dtype=jnp.float32)
    y_true = jax.random.normal(k2, shape, dtype=jnp.float32)
    mask = jax.random.bernoulli(k3, p=0.5, shape=shape)  # bool mask

    loss = masked_mse_loss(y_pred, y_true, mask)
    loss = jax.block_until_ready(loss)

    # Reference check in plain JAX.
    mf = mask.astype(jnp.float32)
    ref = jnp.sum((y_pred - y_true) ** 2 * mf) / jnp.sum(mf)
    assert jnp.allclose(loss, ref, rtol=1e-5, atol=1e-6), (loss, ref)

    print("KERNEL_OK")
</pallas_src>

<mosaic_0001>
module attributes {stable_mosaic.version = 11 : i64} {
  func.func @kernel(%arg0: i32, %arg1: i32, %arg2: memref<64x128xf32, #tpu.memory_space<vmem>>, %arg3: memref<64x128xf32, #tpu.memory_space<vmem>>, %arg4: memref<64x128xi32, #tpu.memory_space<vmem>>, %arg5: memref<1x64x128xf32, #tpu.memory_space<vmem>>, %arg6: memref<1x64x128xf32, #tpu.memory_space<vmem>>) attributes {dimension_semantics = [#tpu.dimension_semantics<parallel>, #tpu.dimension_semantics<arbitrary>], iteration_bounds = array<i64: 2, 1>, scalar_prefetch = 0 : i64, scratch_operands = 0 : i64, tpu.core_type = #tpu.core_type<tc>, window_params = [{transform_indices = @transform_0, window_bounds = array<i64: 64, 128>}, {transform_indices = @transform_1, window_bounds = array<i64: 64, 128>}, {transform_indices = @transform_2, window_bounds = array<i64: 64, 128>}, {transform_indices = @transform_3, window_bounds = array<i64: 1, 64, 128>}, {transform_indices = @transform_4, window_bounds = array<i64: 1, 64, 128>}]} {
    %c1_i32 = arith.constant 1 : i32
    %0 = arith.muli %arg0, %c1_i32 : i32
    %1 = arith.addi %0, %arg1 : i32
    %c0_i32 = arith.constant 0 : i32
    %2 = arith.cmpi eq, %arg1, %c0_i32 : i32
    %3 = arith.extui %2 : i1 to i32
    %c0_i32_0 = arith.constant 0 : i32
    %4 = arith.cmpi ne, %3, %c0_i32_0 : i32
    scf.if %4 {
      %cst = arith.constant 0.000000e+00 : f32
      %11 = vector.broadcast %cst : f32 to vector<1x64x128xf32>
      %c0 = arith.constant 0 : index
      %c0_5 = arith.constant 0 : index
      %c0_6 = arith.constant 0 : index
      %12 = vector.load %arg5[%c0, %c0_5, %c0_6] : memref<1x64x128xf32, #tpu.memory_space<vmem>>, vector<1x64x128xf32>
      tpu.vector_store %arg5[%c0, %c0_5, %c0_6], %11 {strides = array<i32>} : memref<1x64x128xf32, #tpu.memory_space<vmem>>, vector<1x64x128xf32>,
      %cst_7 = arith.constant 0.000000e+00 : f32
      %13 = vector.broadcast %cst_7 : f32 to vector<1x64x128xf32>
      %c0_8 = arith.constant 0 : index
      %c0_9 = arith.constant 0 : index
      %c0_10 = arith.constant 0 : index
      %14 = vector.load %arg6[%c0_8, %c0_9, %c0_10] : memref<1x64x128xf32, #tpu.memory_space<vmem>>, vector<1x64x128xf32>
      tpu.vector_store %arg6[%c0_8, %c0_9, %c0_10], %13 {strides = array<i32>} : memref<1x64x128xf32, #tpu.memory_space<vmem>>, vector<1x64x128xf32>,
    } else {
    }
    %c0_i32_1 = arith.constant 0 : i32
    %5 = arith.cmpi slt, %1, %c0_i32_1 : i32
    %6 = arith.extui %5 : i1 to i32
    %c0_i32_2 = arith.constant 0 : i32
    %7 = arith.cmpi ne, %6, %c0_i32_2 : i32
    scf.if %7 {
      %c0 = arith.constant 0 : index
      %c0_5 = arith.constant 0 : index
      %11 = vector.load %arg4[%c0, %c0_5] : memref<64x128xi32, #tpu.memory_space<vmem>>, vector<64x128xi32>
      %cst = arith.constant dense<0> : vector<64x128xi32>
      %12 = arith.cmpi ne, %11, %cst : vector<64x128xi32>
      %c0_6 = arith.constant 0 : index
      %c0_7 = arith.constant 0 : index
      %13 = vector.load %arg2[%c0_6, %c0_7] : memref<64x128xf32, #tpu.memory_space<vmem>>, vector<64x128xf32>
      %c0_8 = arith.constant 0 : index
      %c0_9 = arith.constant 0 : index
      %14 = vector.load %arg3[%c0_8, %c0_9] : memref<64x128xf32, #tpu.memory_space<vmem>>, vector<64x128xf32>
      %15 = arith.subf %13, %14 : vector<64x128xf32>
      %16 = arith.mulf %15, %15 : vector<64x128xf32>
      %cst_10 = arith.constant 0.000000e+00 : f32
      %17 = vector.broadcast %cst_10 : f32 to vector<64x128xf32>
      %18 = arith.select %12, %16, %17 : vector<64x128xi1>, vector<64x128xf32>
      %cst_11 = arith.constant 1.000000e+00 : f32
      %cst_12 = arith.constant 0.000000e+00 : f32
      %19 = vector.broadcast %cst_11 : f32 to vector<64x128xf32>
      %20 = vector.broadcast %cst_12 : f32 to vector<64x128xf32>
      %21 = arith.select %12, %19, %20 : vector<64x128xi1>, vector<64x128xf32>
      %c0_13 = arith.constant 0 : index
      %c0_14 = arith.constant 0 : index
      %c0_15 = arith.constant 0 : index
      %22 = vector.load %arg5[%c0_13, %c0_14, %c0_15] : memref<1x64x128xf32, #tpu.memory_space<vmem>>, vector<1x64x128xf32>
      %23 = vector.shape_cast %22 : vector<1x64x128xf32> to vector<64x128xf32>
      %24 = vector.shape_cast %18 : vector<64x128xf32> to vector<1x64x128xf32>
      %cst_16 = arith.constant dense<0.000000e+00> : vector<64x128xf32>
      %25 = vector.multi_reduction <add>, %24, %cst_16 [0] : vector<1x64x128xf32> to vector<64x128xf32>
      %26 = arith.addf %23, %25 : vector<64x128xf32>
      %c0_17 = arith.constant 0 : index
      %c0_18 = arith.constant 0 : index
      %c0_19 = arith.constant 0 : index
      %27 = vector.load %arg5[%c0_17, %c0_18, %c0_19] : memref<1x64x128xf32, #tpu.memory_space<vmem>>, vector<1x64x128xf32>
      %28 = vector.shape_cast %27 : vector<1x64x128xf32> to vector<64x128xf32>
      %29 = vector.shape_cast %26 : vector<64x128xf32> to vector<1x64x128xf32>
      tpu.vector_store %arg5[%c0_17, %c0_18, %c0_19], %29 {strides = array<i32>} : memref<1x64x128xf32, #tpu.memory_space<vmem>>, vector<1x64x128xf32>,
      %c0_20 = arith.constant 0 : index
      %c0_21 = arith.constant 0 : index
      %c0_22 = arith.constant 0 : index
      %30 = vector.load %arg6[%c0_20, %c0_21, %c0_22] : memref<1x64x128xf32, #tpu.memory_space<vmem>>, vector<1x64x128xf32>
      %31 = vector.shape_cast %30 : vector<1x64x128xf32> to vector<64x128xf32>
      %32 = vector.shape_cast %21 : vector<64x128xf32> to vector<1x64x128xf32>
      %cst_23 = arith.constant dense<0.000000e+00> : vector<64x128xf32>
      %33 = vector.multi_reduction <add>, %32, %cst_23 [0] : vector<1x64x128xf32> to vector<64x128xf32>
      %34 = arith.addf %31, %33 : vector<64x128xf32>
      %c0_24 = arith.constant 0 : index
      %c0_25 = arith.constant 0 : index
      %c0_26 = arith.constant 0 : index
      %35 = vector.load %arg6[%c0_24, %c0_25, %c0_26] : memref<1x64x128xf32, #tpu.memory_space<vmem>>, vector<1x64x128xf32>
      %36 = vector.shape_cast %35 : vector<1x64x128xf32> to vector<64x128xf32>
      %37 = vector.shape_cast %34 : vector<64x128xf32> to vector<1x64x128xf32>
      tpu.vector_store %arg6[%c0_24, %c0_25, %c0_26], %37 {strides = array<i32>} : memref<1x64x128xf32, #tpu.memory_space<vmem>>, vector<1x64x128xf32>,
    } else {
    }
    %c0_i32_3 = arith.constant 0 : i32
    %8 = arith.cmpi sge, %1, %c0_i32_3 : i32
    %9 = arith.extui %8 : i1 to i32
    %c0_i32_4 = arith.constant 0 : i32
    %10 = arith.cmpi ne, %9, %c0_i32_4 : i32
    scf.if %10 {
      %c64_i32 = arith.constant 64 : i32
      %11 = arith.muli %1, %c64_i32 : i32
      %12 = tpu.iota {dimensions = array<i32: 0>} : vector<64x128xi32>
      %13 = vector.broadcast %11 : i32 to vector<64x128xi32>
      %14 = arith.addi %13, %12 : vector<64x128xi32>
      %c0 = arith.constant 0 : index
      %c0_5 = arith.constant 0 : index
      %15 = vector.load %arg4[%c0, %c0_5] : memref<64x128xi32, #tpu.memory_space<vmem>>, vector<64x128xi32>
      %cst = arith.constant dense<0> : vector<64x128xi32>
      %16 = arith.cmpi ne, %15, %cst : vector<64x128xi32>
      %c16_i32 = arith.constant 16 : i32
      %17 = vector.broadcast %c16_i32 : i32 to vector<64x128xi32>
      %18 = arith.cmpi slt, %14, %17 : vector<64x128xi32>
      %19 = arith.andi %16, %18 : vector<64x128xi1>
      %c0_6 = arith.constant 0 : index
      %c0_7 = arith.constant 0 : index
      %20 = vector.load %arg2[%c0_6, %c0_7] : memref<64x128xf32, #tpu.memory_space<vmem>>, vector<64x128xf32>
      %c0_8 = arith.constant 0 : index
      %c0_9 = arith.constant 0 : index
      %21 = vector.load %arg3[%c0_8, %c0_9] : memref<64x128xf32, #tpu.memory_space<vmem>>, vector<64x128xf32>
      %22 = arith.subf %20, %21 : vector<64x128xf32>
      %23 = arith.mulf %22, %22 : vector<64x128xf32>
      %cst_10 = arith.constant 0.000000e+00 : f32
      %24 = vector.broadcast %cst_10 : f32 to vector<64x128xf32>
      %25 = arith.select %19, %23, %24 : vector<64x128xi1>, vector<64x128xf32>
      %cst_11 = arith.constant 1.000000e+00 : f32
      %cst_12 = arith.constant 0.000000e+00 : f32
      %26 = vector.broadcast %cst_11 : f32 to vector<64x128xf32>
      %27 = vector.broadcast %cst_12 : f32 to vector<64x128xf32>
      %28 = arith.select %19, %26, %27 : vector<64x128xi1>, vector<64x128xf32>
      %c0_13 = arith.constant 0 : index
      %c0_14 = arith.constant 0 : index
      %c0_15 = arith.constant 0 : index
      %29 = vector.load %arg5[%c0_13, %c0_14, %c0_15] : memref<1x64x128xf32, #tpu.memory_space<vmem>>, vector<1x64x128xf32>
      %30 = vector.shape_cast %29 : vector<1x64x128xf32> to vector<64x128xf32>
      %31 = vector.shape_cast %25 : vector<64x128xf32> to vector<1x64x128xf32>
      %cst_16 = arith.constant dense<0.000000e+00> : vector<64x128xf32>
      %32 = vector.multi_reduction <add>, %31, %cst_16 [0] : vector<1x64x128xf32> to vector<64x128xf32>
      %33 = arith.addf %30, %32 : vector<64x128xf32>
      %c0_17 = arith.constant 0 : index
      %c0_18 = arith.constant 0 : index
      %c0_19 = arith.constant 0 : index
      %34 = vector.load %arg5[%c0_17, %c0_18, %c0_19] : memref<1x64x128xf32, #tpu.memory_space<vmem>>, vector<1x64x128xf32>
      %35 = vector.shape_cast %34 : vector<1x64x128xf32> to vector<64x128xf32>
      %36 = vector.shape_cast %33 : vector<64x128xf32> to vector<1x64x128xf32>
      tpu.vector_store %arg5[%c0_17, %c0_18, %c0_19], %36 {strides = array<i32>} : memref<1x64x128xf32, #tpu.memory_space<vmem>>, vector<1x64x128xf32>,
      %c0_20 = arith.constant 0 : index
      %c0_21 = arith.constant 0 : index
      %c0_22 = arith.constant 0 : index
      %37 = vector.load %arg6[%c0_20, %c0_21, %c0_22] : memref<1x64x128xf32, #tpu.memory_space<vmem>>, vector<1x64x128xf32>
      %38 = vector.shape_cast %37 : vector<1x64x128xf32> to vector<64x128xf32>
      %39 = vector.shape_cast %28 : vector<64x128xf32> to vector<1x64x128xf32>
      %cst_23 = arith.constant dense<0.000000e+00> : vector<64x128xf32>
      %40 = vector.multi_reduction <add>, %39, %cst_23 [0] : vector<1x64x128xf32> to vector<64x128xf32>
      %41 = arith.addf %38, %40 : vector<64x128xf32>
      %c0_24 = arith.constant 0 : index
      %c0_25 = arith.constant 0 : index
      %c0_26 = arith.constant 0 : index
      %42 = vector.load %arg6[%c0_24, %c0_25, %c0_26] : memref<1x64x128xf32, #tpu.memory_space<vmem>>, vector<1x64x128xf32>
      %43 = vector.shape_cast %42 : vector<1x64x128xf32> to vector<64x128xf32>
      %44 = vector.shape_cast %41 : vector<64x128xf32> to vector<1x64x128xf32>
      tpu.vector_store %arg6[%c0_24, %c0_25, %c0_26], %44 {strides = array<i32>} : memref<1x64x128xf32, #tpu.memory_space<vmem>>, vector<1x64x128xf32>,
    } else {
    }
    return
  }
  func.func @transform_0(%arg0: i32, %arg1: i32) -> (i32, i32) {
    %c1_i32 = arith.constant 1 : i32
    %0 = arith.muli %arg0, %c1_i32 : i32
    %1 = arith.addi %0, %arg1 : i32
    %c0_i32 = arith.constant 0 : i32
    %2 = arith.minsi %1, %c0_i32 : i32
    %c0_i32_0 = arith.constant 0 : i32
    %c0_i32_1 = arith.constant 0 : i32
    return %2, %c0_i32_0 : i32, i32
  }
  func.func @transform_1(%arg0: i32, %arg1: i32) -> (i32, i32) {
    %c1_i32 = arith.constant 1 : i32
    %0 = arith.muli %arg0, %c1_i32 : i32
    %1 = arith.addi %0, %arg1 : i32
    %c0_i32 = arith.constant 0 : i32
    %2 = arith.minsi %1, %c0_i32 : i32
    %c0_i32_0 = arith.constant 0 : i32
    %c0_i32_1 = arith.constant 0 : i32
    return %2, %c0_i32_0 : i32, i32
  }
  func.func @transform_2(%arg0: i32, %arg1: i32) -> (i32, i32) {
    %c1_i32 = arith.constant 1 : i32
    %0 = arith.muli %arg0, %c1_i32 : i32
    %1 = arith.addi %0, %arg1 : i32
    %c0_i32 = arith.constant 0 : i32
    %2 = arith.minsi %1, %c0_i32 : i32
    %c0_i32_0 = arith.constant 0 : i32
    %c0_i32_1 = arith.constant 0 : i32
    return %2, %c0_i32_0 : i32, i32
  }
  func.func @transform_3(%arg0: i32, %arg1: i32) -> (i32, i32, i32) {
    %c0_i32 = arith.constant 0 : i32
    %c0_i32_0 = arith.constant 0 : i32
    %c0_i32_1 = arith.constant 0 : i32
    return %arg0, %c0_i32, %c0_i32_0 : i32, i32, i32
  }
  func.func @transform_4(%arg0: i32, %arg1: i32) -> (i32, i32, i32) {
    %c0_i32 = arith.constant 0 : i32
    %c0_i32_0 = arith.constant 0 : i32
    %c0_i32_1 = arith.constant 0 : i32
    return %arg0, %c0_i32, %c0_i32_0 : i32, i32, i32
  }
}

</mosaic_0001>

<llo_original>
// kernel: tpu_custom_call.1
$region0: #{tpu_custom_call.1}
  #allocation0 [shape = 'u32[]', space=smem, size = 0x4, offset = 0x4, fixed_abs, tag = 'smem constant byte address 0x4 - core index']
  #allocation1 [shape = 'u32[72,128]{1,0:T(1,128)}', space=vmem, size = 0x9000, scoped, tag = 'internal scratch']
  %s0 = inlined_call_operand.vmem [shape: f32[16,128], index: 0, kind: input, shape index: {}]
  %s1 = inlined_call_operand.hbm [shape: f32[16,128], index: 1, kind: input, shape index: {}]
  %s2 = inlined_call_operand.vmem [shape: s32[16,128], index: 2, kind: input, shape index: {}]
  %s3 = inlined_call_operand.hbm [shape: f32[2,64,128], index: 3, kind: output, shape index: {0}]
  %s4 = inlined_call_operand.hbm [shape: f32[2,64,128], index: 4, kind: output, shape index: {1}]
  %5 = xla_tuple %s3, %s4
  %s6 = sld [smem:[#allocation0]]
  $region69: #{tpu_custom_call.1} parent=0
    _
  %s8 = ssub.s32 1, %s6
  %s9 = scalar_select 0, %s8, %s6
  $region1: #{tpu_custom_call.1} parent=0
    #allocation2 [shape = 'u8[65536]{0}', space=vmem, size = 0x10000, scoped, tag = 'input window, operand 1']
    #allocation3 [shape = 's32[2]{0}', space=sflag, size = 0x8, scoped, tag = 'scoped memory for tpu_custom_call.1']
    #allocation4 [shape = 's32[2]{0}', space=sflag, size = 0x8, scoped, tag = 'scoped memory for tpu_custom_call.1']
    #allocation5 [shape = 'u8[65536]{0}', space=vmem, size = 0x10000, scoped, tag = 'output window, operand 0']
    #allocation6 [shape = 'u8[65536]{0}', space=vmem, size = 0x10000, scoped, tag = 'output window, operand 1']
    #allocation7 [shape = 's32[2]{0}', space=sflag, size = 0x8, scoped, tag = 'scoped memory for tpu_custom_call.1']
    %10 = vsyncpa [#allocation3], 0
    %s11 = scalar_lea.sflag [#allocation3], 1
    %12 = vsyncpa %s11, 0
    %13 = vsyncpa [#allocation4], 0
    %s14 = scalar_lea.sflag [#allocation4], 1
    %15 = vsyncpa %s14, 0
    %16 = vsyncpa [#allocation7], 0
    %s17 = scalar_lea.sflag [#allocation7], 1
    %18 = vsyncpa %s17, 0
    loop: start=0, step=1, limit=4
    $region2: #{tpu_custom_call.1} parent=1 // loop_pre_header
      _
    $region3: #{tpu_custom_call.1} parent=1 // loop_header
      %s20 = sphi 0, %s24
      %p21 = scmp.ge.s32.totalorder %s20, 4
      %s27 = sphi 0, %s39
      %s28 = sphi 0, %s35
      %s29 = sphi 0, %s27
      %s30 = sphi 0, %s28
      %s31 = sphi 0, %s29
      %s32 = sphi 0, %s30
      %s48 = sphi 0, %s50
      %s51 = sphi 0, %s48
      %s52 = sphi 0, %s51
      %s68 = sphi 0, %s52
      %s80 = sphi 0, %s82
      %s83 = sphi 0, %s80
      %s84 = sphi 0, %s83
      %s100 = sphi 0, %s84
      %s112 = sphi 0, %s114
      %s115 = sphi 0, %s112
      %s116 = sphi 0, %s115
      %s132 = sphi 0, %s116
      %s138 = sphi 0, %s140
      %s141 = sphi 0, %s138
      %s142 = sphi 0, %s141
      %s158 = sphi 0, %s142
      %s164 = sphi 0, %s166
      %s167 = sphi 0, %s164
      %s168 = sphi 0, %s167
      %s184 = sphi 0, %s168
    $region4: #{tpu_custom_call.1} parent=1 // loop_header_branch
      %23 = sbr.rel (%p21) target = $region8
    $region5: #{tpu_custom_call.1} parent=1 // loop_body
      %s25 = ssub.s32 %s20, 1
      %s26 = ssub.s32 %s20, 2
      %s33 = sadd.s32 1, %s28
      %p34 = scmp.ge.s32.totalorder %s33, 1
      %s35 = scalar_select %p34, 0, %s33
      %s36 = sadd.s32 1, %s27
      %s37 = scalar_select %p34, %s36, %s27
      %p38 = scmp.ge.s32.totalorder %s37, 2
      %s39 = scalar_select %p38, 0, %s37
      %s40 = sadd.s32 %s27, %s28
      %p41 = scmp.lt.s32.totalorder %s40, 0
      %s42 = scalar_select %p41, %s40, 0
      %s43 = sadd.s32 %s39, %s35
      %p44 = scmp.lt.s32.totalorder %s43, 0
      %s45 = scalar_select %p44, %s43, 0
      %s46 = ssub.s32 %s42, %s45
      %p47 = scmp.eq.s32.totalorder %s46, 0
      %s49 = sadd.s32 %s48, 1
      %s50 = scalar_select %p47, %s48, %s49
      %p53 = pneg %p47
      %p54 = scmp.eq.s32.totalorder %s20, 1
      %p55 = por %p53, %p54
      %p56 = scmp.ne.s32.totalorder %s48, %s51
      %p57 = scmp.eq.s32.totalorder %s20, 0
      %p58 = por %p56, %p57
      %p59 = scmp.ne.s32.totalorder %s48, %s51
      %p60 = scmp.eq.s32.totalorder %s25, 1
      %p61 = por %p59, %p60
      %p62 = scmp.ne.s32.totalorder %s51, %s52
      %p63 = scmp.eq.s32.totalorder %s25, 0
      %p64 = por %p62, %p63
      %p65 = scmp.ne.s32.totalorder %s51, %s52
      %p66 = scmp.eq.s32.totalorder %s26, 1
      %p67 = por %p65, %p66
      %p69 = scmp.ne.s32.totalorder %s52, %s68
      %p70 = scmp.eq.s32.totalorder %s26, 0
      %p71 = por %p69, %p70
      %s72 = sadd.s32 %s27, %s28
      %p73 = scmp.lt.s32.totalorder %s72, 0
      %s74 = scalar_select %p73, %s72, 0
      %s75 = sadd.s32 %s39, %s35
      %p76 = scmp.lt.s32.totalorder %s75, 0
      %s77 = scalar_select %p76, %s75, 0
      %s78 = ssub.s32 %s74, %s77
      %p79 = scmp.eq.s32.totalorder %s78, 0
      %s81 = sadd.s32 %s80, 1
      %s82 = scalar_select %p79, %s80, %s81
      %p85 = pneg %p79
      %p86 = scmp.eq.s32.totalorder %s20, 1
      %p87 = por %p85, %p86
      %p88 = scmp.ne.s32.totalorder %s80, %s83
      %p89 = scmp.eq.s32.totalorder %s20, 0
      %p90 = por %p88, %p89
      %p91 = scmp.ne.s32.totalorder %s80, %s83
      %p92 = scmp.eq.s32.totalorder %s25, 1
      %p93 = por %p91, %p92
      %p94 = scmp.ne.s32.totalorder %s83, %s84
      %p95 = scmp.eq.s32.totalorder %s25, 0
      %p96 = por %p94, %p95
      %p97 = scmp.ne.s32.totalorder %s83, %s84
      %p98 = scmp.eq.s32.totalorder %s26, 1
      %p99 = por %p97, %p98
      %p101 = scmp.ne.s32.totalorder %s84, %s100
      %p102 = scmp.eq.s32.totalorder %s26, 0
      %p103 = por %p101, %p102
      %s104 = sadd.s32 %s27, %s28
      %p105 = scmp.lt.s32.totalorder %s104, 0
      %s106 = scalar_select %p105, %s104, 0
      %s107 = sadd.s32 %s39, %s35
      %p108 = scmp.lt.s32.totalorder %s107, 0
      %s109 = scalar_select %p108, %s107, 0
      %s110 = ssub.s32 %s106, %s109
      %p111 = scmp.eq.s32.totalorder %s110, 0
      %s113 = sadd.s32 %s112, 1
      %s114 = scalar_select %p111, %s112, %s113
      %p117 = pneg %p111
      %p118 = scmp.eq.s32.totalorder %s20, 1
      %p119 = por %p117, %p118
      %p120 = scmp.ne.s32.totalorder %s112, %s115
      %p121 = scmp.eq.s32.totalorder %s20, 0
      %p122 = por %p120, %p121
      %p123 = scmp.ne.s32.totalorder %s112, %s115
      %p124 = scmp.eq.s32.totalorder %s25, 1
      %p125 = por %p123, %p124
      %p126 = scmp.ne.s32.totalorder %s115, %s116
      %p127 = scmp.eq.s32.totalorder %s25, 0
      %p128 = por %p126, %p127
      %p129 = scmp.ne.s32.totalorder %s115, %s116
      %p130 = scmp.eq.s32.totalorder %s26, 1
      %p131 = por %p129, %p130
      %p133 = scmp.ne.s32.totalorder %s116, %s132
      %p134 = scmp.eq.s32.totalorder %s26, 0
      %p135 = por %p133, %p134
      %s136 = ssub.s32 %s27, %s39
      %p137 = scmp.eq.s32.totalorder %s136, 0
      %s139 = sadd.s32 %s138, 1
      %s140 = scalar_select %p137, %s138, %s139
      %p143 = pneg %p137
      %p144 = scmp.eq.s32.totalorder %s20, 1
      %p145 = por %p143, %p144
      %p146 = scmp.ne.s32.totalorder %s138, %s141
      %p147 = scmp.eq.s32.totalorder %s20, 0
      %p148 = por %p146, %p147
      %p149 = scmp.ne.s32.totalorder %s138, %s141
      %p150 = scmp.eq.s32.totalorder %s25, 1
      %p151 = por %p149, %p150
      %p152 = scmp.ne.s32.totalorder %s141, %s142
      %p153 = scmp.eq.s32.totalorder %s25, 0
      %p154 = por %p152, %p153
      %p155 = scmp.ne.s32.totalorder %s141, %s142
      %p156 = scmp.eq.s32.totalorder %s26, 1
      %p157 = por %p155, %p156
      %p159 = scmp.ne.s32.totalorder %s142, %s158
      %p160 = scmp.eq.s32.totalorder %s26, 0
      %p161 = por %p159, %p160
      %s162 = ssub.s32 %s27, %s39
      %p163 = scmp.eq.s32.totalorder %s162, 0
      %s165 = sadd.s32 %s164, 1
      %s166 = scalar_select %p163, %s164, %s165
      %p169 = pneg %p163
      %p170 = scmp.eq.s32.totalorder %s20, 1
      %p171 = por %p169, %p170
      %p172 = scmp.ne.s32.totalorder %s164, %s167
      %p173 = scmp.eq.s32.totalorder %s20, 0
      %p174 = por %p172, %p173
      %p175 = scmp.ne.s32.totalorder %s164, %s167
      %p176 = scmp.eq.s32.totalorder %s25, 1
      %p177 = por %p175, %p176
      %p178 = scmp.ne.s32.totalorder %s167, %s168
      %p179 = scmp.eq.s32.totalorder %s25, 0
      %p180 = por %p178, %p179
      %p181 = scmp.ne.s32.totalorder %s167, %s168
      %p182 = scmp.eq.s32.totalorder %s26, 1
      %p183 = por %p181, %p182
      %p185 = scmp.ne.s32.totalorder %s168, %s184
      %p186 = scmp.eq.s32.totalorder %s26, 0
      %p187 = por %p185, %p186
      %p188 = scmp.le.s32.totalorder 1, %s20
      %p189 = scmp.lt.s32.totalorder %s20, 3
      %p190 = pnand %p188, %p189
      %p191 = pneg %p190
      // Predicated region
      $region9: #{tpu_custom_call.1} parent=5 // pred_check
        _
      $region10: #{tpu_custom_call.1} parent=5 // pred_check_branch
        %193 = sbr.rel (%p190) target = $region12
      $region11: #{tpu_custom_call.1} parent=5 // pred_region
        %s194 = ssub.s32 %s20, 1
      $region12: #{tpu_custom_call.1} parent=5 // pred_fallthru
        _
      %p195 = scmp.lt.s32.totalorder %s20, 2
      // Predicated region
      $region13: #{tpu_custom_call.1} parent=5 // pred_check
        %p196 = pneg %p195
      $region14: #{tpu_custom_call.1} parent=5 // pred_check_branch
        %198 = sbr.rel (%p196) target = $region16
      $region15: #{tpu_custom_call.1} parent=5 // pred_region
        // Predicated region
        $region17: #{tpu_custom_call.1} parent=15 // pred_check
          %p199 = pneg %p58
        $region18: #{tpu_custom_call.1} parent=15 // pred_check_branch
          %201 = sbr.rel (%p199) target = $region20
        $region19: #{tpu_custom_call.1} parent=15 // pred_region
          %s202 = sadd.s32 %s27, %s28
          %p203 = scmp.lt.s32.totalorder %s202, 0
          %s204 = scalar_select %p203, %s202, 0
          %s205 = smul.u32 8, %s204
          %s206 = ssub.s32 2, %s205
          %s207 = smul.u32 8, %s206
          %p208 = scmp.lt.s32.totalorder %s205, 1
          %s209 = scalar_select %p208, %s205, 1
          %s210 = smul.addr %s209, 8
          %s211 = scalar_lea.vmem %s0, %s210
          %s212 = sadd.s32 %s27, %s28
          %p213 = scmp.lt.s32.totalorder %s212, 0
          %s214 = scalar_select %p213, %s212, 0
          %s215 = smul.u32 8, %s214
          %s216 = ssub.s32 2, %s215
          %s217 = smul.u32 8, %s216
        $region20: #{tpu_custom_call.1} parent=15 // pred_fallthru
          _
        // Predicated region
        $region21: #{tpu_custom_call.1} parent=15 // pred_check
          %p218 = pneg %p90
        $region22: #{tpu_custom_call.1} parent=15 // pred_check_branch
          %220 = sbr.rel (%p218) target = $region24
        $region23: #{tpu_custom_call.1} parent=15 // pred_region
          %s221 = sand.u32 %s80, 1
          %s222 = scalar_lea.sflag [#allocation3], %s221
          %s223 = sand.u32 %s80, 1
          %s224 = smul.addr %s223, 64
          %s225 = scalar_lea.vmem [#allocation2], %s224
          %s226 = sadd.s32 %s27, %s28
          %p227 = scmp.lt.s32.totalorder %s226, 0
          %s228 = scalar_select %p227, %s226, 0
          %s229 = smul.u32 8, %s228
          %s230 = ssub.s32 2, %s229
          %s231 = smul.u32 8, %s230
          %s232 = ssub.s32 64, %s231
          %s233 = sshll.u32 %s232, 4
          %234 = vsyncadd %s222, %s233
          %p235 = scmp.ne.s32.totalorder 0, %s231
          %s236 = smul.addr %s229, 8
          %s237 = scalar_lea.hbm %s1, %s236
          %s238 = smul.u32 8, %s230
          %s239 = sshll.u32 %s237, 4
          %s240 = int_to_ptr.hbm [resolvable:$true] %s239
          %s241 = sshll.u32 %s225, 4
          %s242 = int_to_ptr.vmem [resolvable:$true] %s241
          %s243 = sshll.u32 %s238, 4
          %247 = dma.hbm_to_vmem [thread:$0]  (%p235), %s240, %s243, %s242, %s222, 128, 128, 8
        $region24: #{tpu_custom_call.1} parent=15 // pred_fallthru
          _
        // Predicated region
        $region25: #{tpu_custom_call.1} parent=15 // pred_check
          %p248 = pneg %p122
        $region26: #{tpu_custom_call.1} parent=15 // pred_check_branch
          %250 = sbr.rel (%p248) target = $region28
        $region27: #{tpu_custom_call.1} parent=15 // pred_region
          %s251 = sadd.s32 %s27, %s28
          %p252 = scmp.lt.s32.totalorder %s251, 0
          %s253 = scalar_select %p252, %s251, 0
          %s254 = smul.u32 8, %s253
          %s255 = ssub.s32 2, %s254
          %s256 = smul.u32 8, %s255
          %p257 = scmp.lt.s32.totalorder %s254, 1
          %s258 = scalar_select %p257, %s254, 1
          %s259 = smul.addr %s258, 8
          %s260 = scalar_lea.vmem %s2, %s259
          %s261 = sadd.s32 %s27, %s28
          %p262 = scmp.lt.s32.totalorder %s261, 0
          %s263 = scalar_select %p262, %s261, 0
          %s264 = smul.u32 8, %s263
          %s265 = ssub.s32 2, %s264
          %s266 = smul.u32 8, %s265
        $region28: #{tpu_custom_call.1} parent=15 // pred_fallthru
          _
      $region16: #{tpu_custom_call.1} parent=5 // pred_fallthru
        _
      %p267 = scmp.le.s32.totalorder 1, %s20
      %p268 = scmp.lt.s32.totalorder %s20, 3
      %p269 = pnand %p267, %p268
      %p270 = pneg %p269
      // Predicated region
      $region29: #{tpu_custom_call.1} parent=5 // pred_check
        _
      $region30: #{tpu_custom_call.1} parent=5 // pred_check_branch
        %272 = sbr.rel (%p269) target = $region32
      $region31: #{tpu_custom_call.1} parent=5 // pred_region
        %s273 = ssub.s32 %s20, 1
        %s274 = sand.u32 %s83, 1
        %s275 = scalar_lea.sflag [#allocation3], %s274
        %s276 = sand.u32 %s83, 1
        %s277 = smul.addr %s276, 64
        %s278 = scalar_lea.vmem [#allocation2], %s277
        // Predicated region
        $region33: #{tpu_custom_call.1} parent=31 // pred_check
          %p279 = pneg %p96
        $region34: #{tpu_custom_call.1} parent=31 // pred_check_branch
          %281 = sbr.rel (%p279) target = $region36
        $region35: #{tpu_custom_call.1} parent=31 // pred_region
          %283 = dma.done %s275, 1024
        $region36: #{tpu_custom_call.1} parent=31 // pred_fallthru
          _
        %s284 = sadd.s32 %s29, %s30
        %p285 = scmp.lt.s32.totalorder %s284, 0
        %s286 = scalar_select %p285, %s284, 0
        %s287 = smul.u32 8, %s286
        %s288 = ssub.s32 2, %s287
        %s289 = smul.u32 8, %s288
        %p290 = scmp.lt.s32.totalorder %s287, 1
        %s291 = scalar_select %p290, %s287, 1
        %s292 = smul.addr %s291, 8
        %s293 = scalar_lea.vmem %s0, %s292
        %p294 = pneg %p64
        %p295 = pneg %p61
        %s296 = sand.u32 %s83, 1
        %s297 = scalar_lea.sflag [#allocation3], %s296
        %s298 = sand.u32 %s83, 1
        %s299 = smul.addr %s298, 64
        %s300 = scalar_lea.vmem [#allocation2], %s299
        %p301 = pneg %p96
        %p302 = pneg %p93
        %s303 = sadd.s32 %s29, %s30
        %p304 = scmp.lt.s32.totalorder %s303, 0
        %s305 = scalar_select %p304, %s303, 0
        %s306 = smul.u32 8, %s305
        %s307 = ssub.s32 2, %s306
        %s308 = smul.u32 8, %s307
        %p309 = scmp.lt.s32.totalorder %s306, 1
        %s310 = scalar_select %p309, %s306, 1
        %s311 = smul.addr %s310, 8
        %s312 = scalar_lea.vmem %s2, %s311
        %p313 = pneg %p128
        %p314 = pneg %p125
        %p315 = pneg %p154
        %p316 = pneg %p151
        %s317 = sand.u32 %s141, 1
        %s318 = scalar_lea.sflag [#allocation4], %s317
        %s319 = sand.u32 %s141, 1
        %s320 = smul.addr %s319, 64
        %s321 = scalar_lea.vmem [#allocation5], %s320
        %p322 = pneg %p180
        %p323 = pneg %p177
        %s324 = sand.u32 %s167, 1
        %s325 = scalar_lea.sflag [#allocation7], %s324
        %s326 = sand.u32 %s167, 1
        %s327 = smul.addr %s326, 64
        %s328 = scalar_lea.vmem [#allocation6], %s327
        %s329 = sadd.s32 %s29, %s30
        %p330 = scmp.lt.s32.totalorder %s329, 0
        %s331 = scalar_select %p330, %s329, 0
        %s332 = smul.u32 8, %s331
        %s333 = ssub.s32 2, %s332
        %s334 = smul.u32 8, %s333
        %p335 = scmp.lt.s32.totalorder %s332, 1
        %s336 = scalar_select %p335, %s332, 1
        %s337 = smul.addr %s336, 8
        %s338 = scalar_lea.vmem %s0, %s337
        %s339 = sadd.s32 %s29, %s30
        %p340 = scmp.lt.s32.totalorder %s339, 0
        %s341 = scalar_select %p340, %s339, 0
        %s342 = smul.u32 8, %s341
        %s343 = ssub.s32 2, %s342
        %s344 = smul.u32 8, %s343
        %s345 = sadd.s32 %s29, %s30
        %p346 = scmp.lt.s32.totalorder %s345, 0
        %s347 = scalar_select %p346, %s345, 0
        %s348 = smul.u32 8, %s347
        %s349 = ssub.s32 2, %s348
        %s350 = smul.u32 8, %s349
        %s351 = sadd.s32 %s29, %s30
        %p352 = scmp.lt.s32.totalorder %s351, 0
        %s353 = scalar_select %p352, %s351, 0
        %s354 = smul.u32 8, %s353
        %s355 = ssub.s32 2, %s354
        %s356 = smul.u32 8, %s355
        %p357 = scmp.lt.s32.totalorder %s354, 1
        %s358 = scalar_select %p357, %s354, 1
        %s359 = smul.addr %s358, 8
        %s360 = scalar_lea.vmem %s2, %s359
        %s361 = sadd.s32 %s29, %s30
        %p362 = scmp.lt.s32.totalorder %s361, 0
        %s363 = scalar_select %p362, %s361, 0
        %s364 = smul.u32 8, %s363
        %s365 = ssub.s32 2, %s364
        %s366 = smul.u32 8, %s365
        %s367 = sadd.s32 %s29, %s30
        %p368 = scmp.eq.s32.totalorder %s30, 0
        // Predicated region
        $region37: #{tpu_custom_call.1} parent=31 // pred_check
          %p369 = pneg %p368
        $region38: #{tpu_custom_call.1} parent=31 // pred_check_branch
          %371 = sbr.rel (%p369) target = $region40
        $region39: #{tpu_custom_call.1} parent=31 // pred_region
          %372 = vst [vmem:[%s321] sm:$0xff] 0.0
          %373 = vst [vmem:[%s321 + $0x8] sm:$0xff] 0.0
          %374 = vst [vmem:[%s321 + $0x10] sm:$0xff] 0.0
          %375 = vst [vmem:[%s321 + $0x18] sm:$0xff] 0.0
          %376 = vst [vmem:[%s321 + $0x20] sm:$0xff] 0.0
          %377 = vst [vmem:[%s321 + $0x28] sm:$0xff] 0.0
          %378 = vst [vmem:[%s321 + $0x30] sm:$0xff] 0.0
          %379 = vst [vmem:[%s321 + $0x38] sm:$0xff] 0.0
          %380 = vst [vmem:[%s328] sm:$0xff] 0.0
          %381 = vst [vmem:[%s328 + $0x8] sm:$0xff] 0.0
          %382 = vst [vmem:[%s328 + $0x10] sm:$0xff] 0.0
          %383 = vst [vmem:[%s328 + $0x18] sm:$0xff] 0.0
          %384 = vst [vmem:[%s328 + $0x20] sm:$0xff] 0.0
          %385 = vst [vmem:[%s328 + $0x28] sm:$0xff] 0.0
          %386 = vst [vmem:[%s328 + $0x30] sm:$0xff] 0.0
          %387 = vst [vmem:[%s328 + $0x38] sm:$0xff] 0.0
        $region40: #{tpu_custom_call.1} parent=31 // pred_fallthru
          _
        %p388 = scmp.lt.s32.totalorder %s367, 0
        // Predicated region
        $region41: #{tpu_custom_call.1} parent=31 // pred_check
          %p389 = pneg %p388
        $region42: #{tpu_custom_call.1} parent=31 // pred_check_branch
          %391 = sbr.rel (%p389) target = $region44
        $region43: #{tpu_custom_call.1} parent=31 // pred_region
          %v392 = vld [vmem:[%s360] sm:$0xff]
          %v393 = vld [vmem:[%s360 + $0x8] sm:$0xff]
          %v394 = vld [vmem:[%s360 + $0x10] sm:$0xff]
          %v395 = vld [vmem:[%s360 + $0x18] sm:$0xff]
          %v396 = vld [vmem:[%s360 + $0x20] sm:$0xff]
          %v397 = vld [vmem:[%s360 + $0x28] sm:$0xff]
          %v398 = vld [vmem:[%s360 + $0x30] sm:$0xff]
          %v399 = vld [vmem:[%s360 + $0x38] sm:$0xff]
          %vm400 = vcmp.ne.s32.totalorder %v392, 0
          %vm401 = vcmp.ne.s32.totalorder %v393, 0
          %vm402 = vcmp.ne.s32.totalorder %v394, 0
          %vm403 = vcmp.ne.s32.totalorder %v395, 0
          %vm404 = vcmp.ne.s32.totalorder %v396, 0
          %vm405 = vcmp.ne.s32.totalorder %v397, 0
          %vm406 = vcmp.ne.s32.totalorder %v398, 0
          %vm407 = vcmp.ne.s32.totalorder %v399, 0
          %v408 = vld [vmem:[%s338] sm:$0xff]
          %v409 = vld [vmem:[%s338 + $0x8] sm:$0xff]
          %v410 = vld [vmem:[%s338 + $0x10] sm:$0xff]
          %v411 = vld [vmem:[%s338 + $0x18] sm:$0xff]
          %v412 = vld [vmem:[%s338 + $0x20] sm:$0xff]
          %v413 = vld [vmem:[%s338 + $0x28] sm:$0xff]
          %v414 = vld [vmem:[%s338 + $0x30] sm:$0xff]
          %v415 = vld [vmem:[%s338 + $0x38] sm:$0xff]
          %v416 = vld [vmem:[%s278] sm:$0xff]
          %v417 = vld [vmem:[%s278 + $0x8] sm:$0xff]
          %v418 = vld [vmem:[%s278 + $0x10] sm:$0xff]
          %v419 = vld [vmem:[%s278 + $0x18] sm:$0xff]
          %v420 = vld [vmem:[%s278 + $0x20] sm:$0xff]
          %v421 = vld [vmem:[%s278 + $0x28] sm:$0xff]
          %v422 = vld [vmem:[%s278 + $0x30] sm:$0xff]
          %v423 = vld [vmem:[%s278 + $0x38] sm:$0xff]
          %v424 = vsub.f32 %v408, %v416
          %v425 = vsub.f32 %v409, %v417
          %v426 = vsub.f32 %v410, %v418
          %v427 = vsub.f32 %v411, %v419
          %v428 = vsub.f32 %v412, %v420
          %v429 = vsub.f32 %v413, %v421
          %v430 = vsub.f32 %v414, %v422
          %v431 = vsub.f32 %v415, %v423
          %v432 = vmul.f32 %v424, %v424
          %v433 = vmul.f32 %v425, %v425
          %v434 = vmul.f32 %v426, %v426
          %v435 = vmul.f32 %v427, %v427
          %v436 = vmul.f32 %v428, %v428
          %v437 = vmul.f32 %v429, %v429
          %v438 = vmul.f32 %v430, %v430
          %v439 = vmul.f32 %v431, %v431
          %v440 = vsel %vm400, %v432, 0.0
          %v441 = vsel %vm401, %v433, 0.0
          %v442 = vsel %vm402, %v434, 0.0
          %v443 = vsel %vm403, %v435, 0.0
          %v444 = vsel %vm404, %v436, 0.0
          %v445 = vsel %vm405, %v437, 0.0
          %v446 = vsel %vm406, %v438, 0.0
          %v447 = vsel %vm407, %v439, 0.0
          %v448 = vsel %vm400, 1.0, 0.0
          %v449 = vsel %vm401, 1.0, 0.0
          %v450 = vsel %vm402, 1.0, 0.0
          %v451 = vsel %vm403, 1.0, 0.0
          %v452 = vsel %vm404, 1.0, 0.0
          %v453 = vsel %vm405, 1.0, 0.0
          %v454 = vsel %vm406, 1.0, 0.0
          %v455 = vsel %vm407, 1.0, 0.0
          %v456 = vld [vmem:[%s321] sm:$0xff]
          %v457 = vld [vmem:[%s321 + $0x8] sm:$0xff]
          %v458 = vld [vmem:[%s321 + $0x10] sm:$0xff]
          %v459 = vld [vmem:[%s321 + $0x18] sm:$0xff]
          %v460 = vld [vmem:[%s321 + $0x20] sm:$0xff]
          %v461 = vld [vmem:[%s321 + $0x28] sm:$0xff]
          %v462 = vld [vmem:[%s321 + $0x30] sm:$0xff]
          %v463 = vld [vmem:[%s321 + $0x38] sm:$0xff]
          %v464 = vadd.f32 %v440, 0.0
          %v465 = vadd.f32 %v441, 0.0
          %v466 = vadd.f32 %v442, 0.0
          %v467 = vadd.f32 %v443, 0.0
          %v468 = vadd.f32 %v444, 0.0
          %v469 = vadd.f32 %v445, 0.0
          %v470 = vadd.f32 %v446, 0.0
          %v471 = vadd.f32 %v447, 0.0
          %v472 = vadd.f32 %v456, %v464
          %v473 = vadd.f32 %v457, %v465
          %v474 = vadd.f32 %v458, %v466
          %v475 = vadd.f32 %v459, %v467
          %v476 = vadd.f32 %v460, %v468
          %v477 = vadd.f32 %v461, %v469
          %v478 = vadd.f32 %v462, %v470
          %v479 = vadd.f32 %v463, %v471
          %480 = vst [vmem:[%s321] sm:$0xff] %v472
          %481 = vst [vmem:[%s321 + $0x8] sm:$0xff] %v473
          %482 = vst [vmem:[%s321 + $0x10] sm:$0xff] %v474
          %483 = vst [vmem:[%s321 + $0x18] sm:$0xff] %v475
          %484 = vst [vmem:[%s321 + $0x20] sm:$0xff] %v476
          %485 = vst [vmem:[%s321 + $0x28] sm:$0xff] %v477
          %486 = vst [vmem:[%s321 + $0x30] sm:$0xff] %v478
          %487 = vst [vmem:[%s321 + $0x38] sm:$0xff] %v479
          %v488 = vld [vmem:[%s328] sm:$0xff]
          %v489 = vld [vmem:[%s328 + $0x8] sm:$0xff]
          %v490 = vld [vmem:[%s328 + $0x10] sm:$0xff]
          %v491 = vld [vmem:[%s328 + $0x18] sm:$0xff]
          %v492 = vld [vmem:[%s328 + $0x20] sm:$0xff]
          %v493 = vld [vmem:[%s328 + $0x28] sm:$0xff]
          %v494 = vld [vmem:[%s328 + $0x30] sm:$0xff]
          %v495 = vld [vmem:[%s328 + $0x38] sm:$0xff]
          %v496 = vadd.f32 %v448, 0.0
          %v497 = vadd.f32 %v449, 0.0
          %v498 = vadd.f32 %v450, 0.0
          %v499 = vadd.f32 %v451, 0.0
          %v500 = vadd.f32 %v452, 0.0
          %v501 = vadd.f32 %v453, 0.0
          %v502 = vadd.f32 %v454, 0.0
          %v503 = vadd.f32 %v455, 0.0
          %v504 = vadd.f32 %v488, %v496
          %v505 = vadd.f32 %v489, %v497
          %v506 = vadd.f32 %v490, %v498
          %v507 = vadd.f32 %v491, %v499
          %v508 = vadd.f32 %v492, %v500
          %v509 = vadd.f32 %v493, %v501
          %v510 = vadd.f32 %v494, %v502
          %v511 = vadd.f32 %v495, %v503
          %512 = vst [vmem:[%s328] sm:$0xff] %v504
          %513 = vst [vmem:[%s328 + $0x8] sm:$0xff] %v505
          %514 = vst [vmem:[%s328 + $0x10] sm:$0xff] %v506
          %515 = vst [vmem:[%s328 + $0x18] sm:$0xff] %v507
          %516 = vst [vmem:[%s328 + $0x20] sm:$0xff] %v508
          %517 = vst [vmem:[%s328 + $0x28] sm:$0xff] %v509
          %518 = vst [vmem:[%s328 + $0x30] sm:$0xff] %v510
          %519 = vst [vmem:[%s328 + $0x38] sm:$0xff] %v511
        $region44: #{tpu_custom_call.1} parent=31 // pred_fallthru
          _
        %p520 = scmp.ge.s32.totalorder %s367, 0
        // Predicated region
        $region45: #{tpu_custom_call.1} parent=31 // pred_check
          %p521 = pneg %p520
        $region46: #{tpu_custom_call.1} parent=31 // pred_check_branch
          %523 = sbr.rel (%p521) target = $region48
        $region47: #{tpu_custom_call.1} parent=31 // pred_region
          %s524 = smul.u32 %s367, 64
          %v525 = vlaneseq
          %v526 = vshrl.u32 %v525, 7
          %v527 = vadd.s32 %v526, 8
          %v528 = vadd.s32 %v526, 16
          %v529 = vadd.s32 %v526, 24
          %v530 = vadd.s32 %v526, 32
          %v531 = vadd.s32 %v526, 40
          %v532 = vadd.s32 %v526, 48
          %v533 = vadd.s32 %v526, 56
          %v534 = vstv %s524
          %v535 = vadd.s32 %v534, %v526
          %v536 = vadd.s32 %v534, %v527
          %v537 = vadd.s32 %v534, %v528
          %v538 = vadd.s32 %v534, %v529
          %v539 = vadd.s32 %v534, %v530
          %v540 = vadd.s32 %v534, %v531
          %v541 = vadd.s32 %v534, %v532
          %v542 = vadd.s32 %v534, %v533
          %v543 = vld [vmem:[%s360] sm:$0xff]
          %v544 = vld [vmem:[%s360 + $0x8] sm:$0xff]
          %v545 = vld [vmem:[%s360 + $0x10] sm:$0xff]
          %v546 = vld [vmem:[%s360 + $0x18] sm:$0xff]
          %v547 = vld [vmem:[%s360 + $0x20] sm:$0xff]
          %v548 = vld [vmem:[%s360 + $0x28] sm:$0xff]
          %v549 = vld [vmem:[%s360 + $0x30] sm:$0xff]
          %v550 = vld [vmem:[%s360 + $0x38] sm:$0xff]
          %vm551 = vcmp.ne.s32.totalorder %v543, 0
          %vm552 = vcmp.ne.s32.totalorder %v544, 0
          %vm553 = vcmp.ne.s32.totalorder %v545, 0
          %vm554 = vcmp.ne.s32.totalorder %v546, 0
          %vm555 = vcmp.ne.s32.totalorder %v547, 0
          %vm556 = vcmp.ne.s32.totalorder %v548, 0
          %vm557 = vcmp.ne.s32.totalorder %v549, 0
          %vm558 = vcmp.ne.s32.totalorder %v550, 0
          %vm559 = vcmp.lt.s32.totalorder %v535, 16
          %vm560 = vcmp.lt.s32.totalorder %v536, 16
          %vm561 = vcmp.lt.s32.totalorder %v537, 16
          %vm562 = vcmp.lt.s32.totalorder %v538, 16
          %vm563 = vcmp.lt.s32.totalorder %v539, 16
          %vm564 = vcmp.lt.s32.totalorder %v540, 16
          %vm565 = vcmp.lt.s32.totalorder %v541, 16
          %vm566 = vcmp.lt.s32.totalorder %v542, 16
          %vm567 = vmand %vm551, %vm559
          %vm568 = vmand %vm552, %vm560
          %vm569 = vmand %vm553, %vm561
          %vm570 = vmand %vm554, %vm562
          %vm571 = vmand %vm555, %vm563
          %vm572 = vmand %vm556, %vm564
          %vm573 = vmand %vm557, %vm565
          %vm574 = vmand %vm558, %vm566
          %v575 = vld [vmem:[%s338] sm:$0xff]
          %v576 = vld [vmem:[%s338 + $0x8] sm:$0xff]
          %v577 = vld [vmem:[%s338 + $0x10] sm:$0xff]
          %v578 = vld [vmem:[%s338 + $0x18] sm:$0xff]
          %v579 = vld [vmem:[%s338 + $0x20] sm:$0xff]
          %v580 = vld [vmem:[%s338 + $0x28] sm:$0xff]
          %v581 = vld [vmem:[%s338 + $0x30] sm:$0xff]
          %v582 = vld [vmem:[%s338 + $0x38] sm:$0xff]
          %v583 = vld [vmem:[%s278] sm:$0xff]
          %v584 = vld [vmem:[%s278 + $0x8] sm:$0xff]
          %v585 = vld [vmem:[%s278 + $0x10] sm:$0xff]
          %v586 = vld [vmem:[%s278 + $0x18] sm:$0xff]
          %v587 = vld [vmem:[%s278 + $0x20] sm:$0xff]
          %v588 = vld [vmem:[%s278 + $0x28] sm:$0xff]
          %v589 = vld [vmem:[%s278 + $0x30] sm:$0xff]
          %v590 = vld [vmem:[%s278 + $0x38] sm:$0xff]
          %v591 = vsub.f32 %v575, %v583
          %v592 = vsub.f32 %v576, %v584
          %v593 = vsub.f32 %v577, %v585
          %v594 = vsub.f32 %v578, %v586
          %v595 = vsub.f32 %v579, %v587
          %v596 = vsub.f32 %v580, %v588
          %v597 = vsub.f32 %v581, %v589
          %v598 = vsub.f32 %v582, %v590
          %v599 = vmul.f32 %v591, %v591
          %v600 = vmul.f32 %v592, %v592
          %v601 = vmul.f32 %v593, %v593
          %v602 = vmul.f32 %v594, %v594
          %v603 = vmul.f32 %v595, %v595
          %v604 = vmul.f32 %v596, %v596
          %v605 = vmul.f32 %v597, %v597
          %v606 = vmul.f32 %v598, %v598
          %v607 = vsel %vm567, %v599, 0.0
          %v608 = vsel %vm568, %v600, 0.0
          %v609 = vsel %vm569, %v601, 0.0
          %v610 = vsel %vm570, %v602, 0.0
          %v611 = vsel %vm571, %v603, 0.0
          %v612 = vsel %vm572, %v604, 0.0
          %v613 = vsel %vm573, %v605, 0.0
          %v614 = vsel %vm574, %v606, 0.0
          %v615 = vsel %vm567, 1.0, 0.0
          %v616 = vsel %vm568, 1.0, 0.0
          %v617 = vsel %vm569, 1.0, 0.0
          %v618 = vsel %vm570, 1.0, 0.0
          %v619 = vsel %vm571, 1.0, 0.0
          %v620 = vsel %vm572, 1.0, 0.0
          %v621 = vsel %vm573, 1.0, 0.0
          %v622 = vsel %vm574, 1.0, 0.0
          %v623 = vld [vmem:[%s321] sm:$0xff]
          %v624 = vld [vmem:[%s321 + $0x8] sm:$0xff]
          %v625 = vld [vmem:[%s321 + $0x10] sm:$0xff]
          %v626 = vld [vmem:[%s321 + $0x18] sm:$0xff]
          %v627 = vld [vmem:[%s321 + $0x20] sm:$0xff]
          %v628 = vld [vmem:[%s321 + $0x28] sm:$0xff]
          %v629 = vld [vmem:[%s321 + $0x30] sm:$0xff]
          %v630 = vld [vmem:[%s321 + $0x38] sm:$0xff]
          %v631 = vadd.f32 %v607, 0.0
          %v632 = vadd.f32 %v608, 0.0
          %v633 = vadd.f32 %v609, 0.0
          %v634 = vadd.f32 %v610, 0.0
          %v635 = vadd.f32 %v611, 0.0
          %v636 = vadd.f32 %v612, 0.0
          %v637 = vadd.f32 %v613, 0.0
          %v638 = vadd.f32 %v614, 0.0
          %v639 = vadd.f32 %v623, %v631
          %v640 = vadd.f32 %v624, %v632
          %v641 = vadd.f32 %v625, %v633
          %v642 = vadd.f32 %v626, %v634
          %v643 = vadd.f32 %v627, %v635
          %v644 = vadd.f32 %v628, %v636
          %v645 = vadd.f32 %v629, %v637
          %v646 = vadd.f32 %v630, %v638
          %647 = vst [vmem:[%s321] sm:$0xff] %v639
          %648 = vst [vmem:[%s321 + $0x8] sm:$0xff] %v640
          %649 = vst [vmem:[%s321 + $0x10] sm:$0xff] %v641
          %650 = vst [vmem:[%s321 + $0x18] sm:$0xff] %v642
          %651 = vst [vmem:[%s321 + $0x20] sm:$0xff] %v643
          %652 = vst [vmem:[%s321 + $0x28] sm:$0xff] %v644
          %653 = vst [vmem:[%s321 + $0x30] sm:$0xff] %v645
          %654 = vst [vmem:[%s321 + $0x38] sm:$0xff] %v646
          %v655 = vld [vmem:[%s328] sm:$0xff]
          %v656 = vld [vmem:[%s328 + $0x8] sm:$0xff]
          %v657 = vld [vmem:[%s328 + $0x10] sm:$0xff]
          %v658 = vld [vmem:[%s328 + $0x18] sm:$0xff]
          %v659 = vld [vmem:[%s328 + $0x20] sm:$0xff]
          %v660 = vld [vmem:[%s328 + $0x28] sm:$0xff]
          %v661 = vld [vmem:[%s328 + $0x30] sm:$0xff]
          %v662 = vld [vmem:[%s328 + $0x38] sm:$0xff]
          %v663 = vadd.f32 %v615, 0.0
          %v664 = vadd.f32 %v616, 0.0
          %v665 = vadd.f32 %v617, 0.0
          %v666 = vadd.f32 %v618, 0.0
          %v667 = vadd.f32 %v619, 0.0
          %v668 = vadd.f32 %v620, 0.0
          %v669 = vadd.f32 %v621, 0.0
          %v670 = vadd.f32 %v622, 0.0
          %v671 = vadd.f32 %v655, %v663
          %v672 = vadd.f32 %v656, %v664
          %v673 = vadd.f32 %v657, %v665
          %v674 = vadd.f32 %v658, %v666
          %v675 = vadd.f32 %v659, %v667
          %v676 = vadd.f32 %v660, %v668
          %v677 = vadd.f32 %v661, %v669
          %v678 = vadd.f32 %v662, %v670
          %679 = vst [vmem:[%s328] sm:$0xff] %v671
          %680 = vst [vmem:[%s328 + $0x8] sm:$0xff] %v672
          %681 = vst [vmem:[%s328 + $0x10] sm:$0xff] %v673
          %682 = vst [vmem:[%s328 + $0x18] sm:$0xff] %v674
          %683 = vst [vmem:[%s328 + $0x20] sm:$0xff] %v675
          %684 = vst [vmem:[%s328 + $0x28] sm:$0xff] %v676
          %685 = vst [vmem:[%s328 + $0x30] sm:$0xff] %v677
          %686 = vst [vmem:[%s328 + $0x38] sm:$0xff] %v678
        $region48: #{tpu_custom_call.1} parent=31 // pred_fallthru
          _
        %s687 = sand.u32 %s141, 1
        %s688 = scalar_lea.sflag [#allocation4], %s687
        %s689 = sand.u32 %s141, 1
        %s690 = smul.addr %s689, 64
        %s691 = scalar_lea.vmem [#allocation5], %s690
        %s692 = sand.u32 %s167, 1
        %s693 = scalar_lea.sflag [#allocation7], %s692
        %s694 = sand.u32 %s167, 1
        %s695 = smul.addr %s694, 64
        %s696 = scalar_lea.vmem [#allocation6], %s695
        // Predicated region
        $region49: #{tpu_custom_call.1} parent=31 // pred_check
          %p697 = pneg %p151
        $region50: #{tpu_custom_call.1} parent=31 // pred_check_branch
          %699 = sbr.rel (%p697) target = $region52
        $region51: #{tpu_custom_call.1} parent=31 // pred_region
          %701 = vsyncadd %s688, 0
          %s702 = smul.addr %s29, 8
          %s703 = smul.addr %s702, 8
          %s704 = scalar_lea.hbm %s3, %s703
          %s705 = sshll.u32 %s691, 4
          %s706 = int_to_ptr.vmem [resolvable:$true] %s705
          %s707 = sshll.u32 %s704, 4
          %s708 = int_to_ptr.hbm [resolvable:$true] %s707
          %713 = dma.vmem_to_hbm [thread:$0]  %s706, 1024, %s708, %s688, 128, 128, 8
        $region52: #{tpu_custom_call.1} parent=31 // pred_fallthru
          _
        // Predicated region
        $region53: #{tpu_custom_call.1} parent=31 // pred_check
          %p714 = pneg %p177
        $region54: #{tpu_custom_call.1} parent=31 // pred_check_branch
          %716 = sbr.rel (%p714) target = $region56
        $region55: #{tpu_custom_call.1} parent=31 // pred_region
          %718 = vsyncadd %s693, 0
          %s719 = smul.addr %s29, 8
          %s720 = smul.addr %s719, 8
          %s721 = scalar_lea.hbm %s4, %s720
          %s722 = sshll.u32 %s696, 4
          %s723 = int_to_ptr.vmem [resolvable:$true] %s722
          %s724 = sshll.u32 %s721, 4
          %s725 = int_to_ptr.hbm [resolvable:$true] %s724
          %730 = dma.vmem_to_hbm [thread:$0]  %s723, 1024, %s725, %s693, 128, 128, 8
        $region56: #{tpu_custom_call.1} parent=31 // pred_fallthru
          _
      $region32: #{tpu_custom_call.1} parent=5 // pred_fallthru
        _
      %p731 = scmp.le.s32.totalorder 2, %s20
      // Predicated region
      $region57: #{tpu_custom_call.1} parent=5 // pred_check
        %p732 = pneg %p731
      $region58: #{tpu_custom_call.1} parent=5 // pred_check_branch
        %734 = sbr.rel (%p732) target = $region60
      $region59: #{tpu_custom_call.1} parent=5 // pred_region
        %s735 = ssub.s32 %s20, 2
        // Predicated region
        $region61: #{tpu_custom_call.1} parent=59 // pred_check
          %p736 = pneg %p157
        $region62: #{tpu_custom_call.1} parent=59 // pred_check_branch
          %738 = sbr.rel (%p736) target = $region64
        $region63: #{tpu_custom_call.1} parent=59 // pred_region
          %s739 = sand.u32 %s142, 1
          %s740 = scalar_lea.sflag [#allocation4], %s739
          %s741 = sand.u32 %s142, 1
          %s742 = smul.addr %s741, 64
          %s743 = scalar_lea.vmem [#allocation5], %s742
          %745 = dma.done %s740, 1024
        $region64: #{tpu_custom_call.1} parent=59 // pred_fallthru
          _
        // Predicated region
        $region65: #{tpu_custom_call.1} parent=59 // pred_check
          %p746 = pneg %p183
        $region66: #{tpu_custom_call.1} parent=59 // pred_check_branch
          %748 = sbr.rel (%p746) target = $region68
        $region67: #{tpu_custom_call.1} parent=59 // pred_region
          %s749 = sand.u32 %s168, 1
          %s750 = scalar_lea.sflag [#allocation7], %s749
          %s751 = sand.u32 %s168, 1
          %s752 = smul.addr %s751, 64
          %s753 = scalar_lea.vmem [#allocation6], %s752
          %755 = dma.done %s750, 1024
        $region68: #{tpu_custom_call.1} parent=59 // pred_fallthru
          _
      $region60: #{tpu_custom_call.1} parent=5 // pred_fallthru
        _
    $region6: #{tpu_custom_call.1} parent=1 // loop_footer
      %s24 = sadd.s32 1, %s20
    $region7: #{tpu_custom_call.1} parent=1 // loop_footer_branch
      %19 = sbr.rel target = $region3
    $region8: #{tpu_custom_call.1} parent=1 // loop_exit
      _
    %756 = vsyncpa [#allocation3], 1
    %s757 = scalar_lea.sflag [#allocation3], 1
    %758 = vsyncpa %s757, 1
    %759 = vsyncpa [#allocation4], 1
    %s760 = scalar_lea.sflag [#allocation4], 1
    %761 = vsyncpa %s760, 1
    %762 = vsyncpa [#allocation7], 1
    %s763 = scalar_lea.sflag [#allocation7], 1
    %764 = vsyncpa %s763, 1

</llo_original>
